<compile_context>
chip_gen: v7x
topology: tpu7x:2x2x1
jax: 0.10.0
libtpu: 0.0.40
codegen_flags: <defaults>
</compile_context>

<pallas_src>
import math

import jax
import jax.numpy as jnp
from jax import lax
from jax.experimental import pallas as pl
from jax.experimental.pallas import tpu as pltpu


# ----------------------------------------------------------------------------
# Kernel
# ----------------------------------------------------------------------------
def _make_kernel(num_blocks, input_dim, hidden, approximate_gelu, compute_dtype):
    """Kernel for one (batch_tile, time_step) grid point.

    Ref order:
      x, state_packed, w0_pad, b0_pad,
      (Wblk_j, bblk_j) * num_blocks,          # block-diag(hidden layer, transition/I)
      W_final, b_final,
      combined_out,                           # (1, TILE_B, 2H) lane-dense output
      state_scratch                           # (TILE_B, 2H) f32 VMEM carry
    """
    P = 2 * hidden

    def gelu(v):
        if approximate_gelu:
            return jax.nn.gelu(v, approximate=True)      # tanh path -> EUP
        return 0.5 * v * (1.0 + lax.erf(v * (1.0 / math.sqrt(2.0))))  # torch exact

    def kernel(*refs):
        x_ref, state_ref = refs[0], refs[1]
        w0_ref, b0_ref = refs[2], refs[3]
        block_refs = refs[4:4 + 2 * num_blocks]
        wf_ref, bf_ref = refs[4 + 2 * num_blocks], refs[5 + 2 * num_blocks]
        out_ref = refs[-2]
        state_sc = refs[-1]

        t = pl.program_id(1)

        # Initialize the carried state for this batch tile at the first step.
        @pl.when(t == 0)
        def _():
            state_sc[...] = state_ref[...].astype(jnp.float32)

        # Lane mask: lanes [0, hidden) carry the observation path,
        #            lanes [hidden, 2*hidden) carry the state path.
        lane = lax.broadcasted_iota(jnp.int32, (1, P), 1)
        obs_lanes = lane < hidden

        # ---- first layer: (B, in) x (in, 2H) -------------------------------
        x = x_ref[0].astype(jnp.float32)                 # (TILE_B, in_dim)
        w0 = w0_ref[...].astype(jnp.float32)             # (in_dim, 2H) (state half = 0)
        b0 = b0_ref[...].astype(jnp.float32)             # (1, 2H)
        if input_dim == 1:
            # K=1 matmul would waste >99% of the MXU; do it on the VPU.
            h = x * w0 + b0                              # broadcast mul-add
        else:
            h = jnp.dot(x, w0, preferred_element_type=jnp.float32) + b0

        # Pack [gelu(h1) | state] into one lane-dense (TILE_B, 2H) tile.
        p = jnp.where(obs_lanes, gelu(h), state_sc[...])

        # ---- fused hidden layer(s) + state transition (block-diagonal MXU) --
        for j in range(num_blocks):
            wb = block_refs[2 * j][...]
            bb = block_refs[2 * j + 1][...].astype(jnp.float32)
            z = jnp.dot(p.astype(compute_dtype), wb.astype(compute_dtype),
                        preferred_element_type=jnp.float32) + bb
            p = jnp.where(obs_lanes, gelu(z), z)         # GELU only on obs lanes

        # ---- final layer (h -> out) + identity passthrough of the state -----
        wf = wf_ref[...]
        bf = bf_ref[...].astype(jnp.float32)
        out = jnp.dot(p.astype(compute_dtype), wf.astype(compute_dtype),
                      preferred_element_type=jnp.float32) + bf

        out_ref[0] = out.astype(out_ref.dtype)           # lane-dense (TILE_B, 2H) store
        state_sc[...] = out                              # carry state (lanes [H, 2H))

    return kernel


# ----------------------------------------------------------------------------
# Parameter packing (done once, in plain XLA)
# ----------------------------------------------------------------------------
def pack_params(obs_weights, obs_biases, wt, bt, dtype=jnp.float32):
    """Build padded / block-diagonal weights for the fused kernel.

    obs_weights[i]: (in_i, out_i) already transposed vs torch Linear.
    """
    H = wt.shape[0]
    P = 2 * H
    in_dim = obs_weights[0].shape[0]
    out_dim = obs_weights[-1].shape[1]
    num_hidden = len(obs_weights) - 2          # number of 64->64 hidden layers

    # First layer, padded so its output is already a 2H-lane tile (state half 0).
    w0 = jnp.zeros((in_dim, P), dtype).at[:, :H].set(obs_weights[0].astype(dtype))
    b0 = jnp.zeros((1, P), dtype).at[:, :H].set(obs_biases[0].reshape(1, H).astype(dtype))

    # Hidden layers as block-diagonal (2H, 2H) matmuls; the first one also carries
    # the state transition, later ones carry the state through an identity block.
    blocks = []
    for j in range(num_hidden):
        W = obs_weights[1 + j].astype(dtype)
        b = obs_biases[1 + j].reshape(1, H).astype(dtype)
        if j == 0:
            br_W, br_b = wt.astype(dtype), bt.reshape(1, H).astype(dtype)
        else:
            br_W, br_b = jnp.eye(H, dtype=dtype), jnp.zeros((1, H), dtype)
        Wb = jnp.zeros((P, P), dtype).at[:H, :H].set(W).at[H:, H:].set(br_W)
        bb = jnp.concatenate([b, br_b], axis=1)
        blocks.append((Wb, bb))

    # Final layer: obs head in the top-left block, state passthrough (identity,
    # or the transition itself when there are no hidden layers) bottom-right.
    Wf = jnp.zeros((P, P), dtype).at[:H, :out_dim].set(obs_weights[-1].astype(dtype))
    if num_hidden >= 1:
        Wf = Wf.at[H:, H:].set(jnp.eye(H, dtype=dtype))
        bf_state = jnp.zeros((1, H), dtype)
    else:
        Wf = Wf.at[H:, H:].set(wt.astype(dtype))
        bf_state = bt.reshape(1, H).astype(dtype)
    bf_obs = jnp.zeros((1, H), dtype).at[:, :out_dim].set(
        obs_biases[-1].reshape(1, out_dim).astype(dtype))
    bf = jnp.concatenate([bf_obs, bf_state], axis=1)

    return w0, b0, blocks, Wf, bf


# ----------------------------------------------------------------------------
# Wrappers
# ----------------------------------------------------------------------------
def ssm_scan(xs, state0, obs_weights, obs_biases, wt, bt, *,
             tile_b=None, approximate_gelu=False, use_bf16_matmul=False):
    """Run the SSM forward for T consecutive timesteps in ONE pallas_call.

    xs:     (T, B, input_dim)
    state0: (B, hidden_dim)
    Returns (observations (T, B, output_dim), final_state (B, hidden_dim)).
    Each timestep is exactly the PyTorch module's forward.
    """
    T, B, in_dim = xs.shape
    H = wt.shape[0]
    P = 2 * H
    out_dim = obs_weights[-1].shape[1]

    if tile_b is None:
        tile_b = B if B <= 512 else 512     # big tiles amortize per-step overhead
    assert B % tile_b == 0
    nb = B // tile_b

    w0, b0, blocks, Wf, bf = pack_params(obs_weights, obs_biases, wt, bt)

    # State packed into lanes [H, 2H) of a lane-dense 2H tile.
    state_packed = jnp.zeros((B, P), state0.dtype).at[:, H:].set(state0)

    operands = [xs, state_packed, w0, b0]
    for Wb, bb in blocks:
        operands += [Wb, bb]
    operands += [Wf, bf]

    def const_spec(shape):
        # Weights: constant block index -> resident in VMEM, never re-DMA'd.
        return pl.BlockSpec(shape, lambda b, t: (0,) * len(shape))

    in_specs = [
        pl.BlockSpec((1, tile_b, in_dim), lambda b, t: (t, b, 0)),   # x[t, tile_b]
        pl.BlockSpec((tile_b, P), lambda b, t: (b, 0)),              # initial state
        const_spec(w0.shape), const_spec(b0.shape),
    ]
    for Wb, bb in blocks:
        in_specs += [const_spec(Wb.shape), const_spec(bb.shape)]
    in_specs += [const_spec(Wf.shape), const_spec(bf.shape)]

    out_specs = pl.BlockSpec((1, tile_b, P), lambda b, t: (t, b, 0))
    out_shape = jax.ShapeDtypeStruct((T, B, P), xs.dtype)

    kernel = _make_kernel(
        num_blocks=len(blocks),
        input_dim=in_dim,
        hidden=H,
        approximate_gelu=approximate_gelu,
        compute_dtype=jnp.bfloat16 if use_bf16_matmul else jnp.float32,
    )

    combined = pl.pallas_call(
        kernel,
        grid=(nb, T),
        in_specs=in_specs,
        out_specs=out_specs,
        out_shape=out_shape,
        scratch_shapes=[pltpu.VMEM((tile_b, P), jnp.float32)],
        compiler_params=pltpu.CompilerParams(
            dimension_semantics=("parallel", "arbitrary"),
            vmem_limit_bytes=32 * 1024 * 1024,
        ),
    )(*operands)

    obs = combined[:, :, :out_dim]           # lane 0..out_dim-1
    new_state = combined[T - 1, :, H:]       # lanes H..2H-1 of the last step
    return obs, new_state


def ssm_forward(x, state, obs_weights, obs_biases, wt, bt, **kw):
    """Single-step forward matching StateSpaceModel.forward(x, state)."""
    obs, new_state = ssm_scan(x[None], state, obs_weights, obs_biases, wt, bt, **kw)
    return obs[0], new_state


# ----------------------------------------------------------------------------
# Reference + init
# ----------------------------------------------------------------------------
def _gelu_exact(x):
    return 0.5 * x * (1.0 + lax.erf(x * (1.0 / math.sqrt(2.0))))


def reference_scan(xs, state0, obs_weights, obs_biases, wt, bt):
    """Pure-JAX reference: apply the PyTorch module's forward per timestep."""
    n = len(obs_weights)
    obs_list = []
    state = state0
    for t in range(xs.shape[0]):
        h = xs[t]
        for i, (w, b) in enumerate(zip(obs_weights, obs_biases)):
            h = h @ w + b.reshape(1, -1)
            if i < n - 1:
                h = _gelu_exact(h)
        obs_list.append(h)
        state = state @ wt + bt.reshape(1, -1)
    return jnp.stack(obs_list), state


def init_params(key, input_dim, hidden_dim, output_dim, num_layers, dtype=jnp.float32):
    """PyTorch-like uniform fan-in init; weights returned pre-transposed (in, out)."""
    dims = [input_dim] + [hidden_dim] * num_layers + [output_dim]
    obs_weights, obs_biases = [], []
    for i in range(len(dims) - 1):
        fan_in, fan_out = dims[i], dims[i + 1]
        key, kw, kb = jax.random.split(key, 3)
        bound = 1.0 / math.sqrt(fan_in)
        obs_weights.append(jax.random.uniform(kw, (fan_in, fan_out), dtype, -bound, bound))
        obs_biases.append(jax.random.uniform(kb, (1, fan_out), dtype, -bound, bound))
    key, kw, kb = jax.random.split(key, 3)
    bound = 1.0 / math.sqrt(hidden_dim)
    wt = jax.random.uniform(kw, (hidden_dim, hidden_dim), dtype, -bound, bound)
    bt = jax.random.uniform(kb, (1, hidden_dim), dtype, -bound, bound)
    return obs_weights, obs_biases, wt, bt


if __name__ == "__main__":
    # Module constants from SSM_4.py: input_dim=1, hidden_dim=64, output_dim=1.
    input_dim, hidden_dim, output_dim = 1, 64, 1
    num_layers = 2
    batch = 8
    T = 8

    key = jax.random.PRNGKey(0)
    key, kx, ks = jax.random.split(key, 3)
    xs = jax.random.normal(kx, (T, batch, input_dim), jnp.float32)
    state0 = jax.random.normal(ks, (batch, hidden_dim), jnp.float32)

    obs_weights, obs_biases, wt, bt = init_params(
        key, input_dim, hidden_dim, output_dim, num_layers)

    # Fused multi-timestep scan (time loop inside the kernel).
    obs, new_state = ssm_scan(xs, state0, obs_weights, obs_biases, wt, bt)
    jax.block_until_ready((obs, new_state))

    obs_ref, state_ref_out = reference_scan(xs, state0, obs_weights, obs_biases, wt, bt)
    assert obs.shape == (T, batch, output_dim)
    assert new_state.shape == (batch, hidden_dim)
    assert jnp.allclose(obs, obs_ref, atol=1e-4, rtol=1e-4), \
        float(jnp.max(jnp.abs(obs - obs_ref)))
    assert jnp.allclose(new_state, state_ref_out, atol=1e-4, rtol=1e-4), \
        float(jnp.max(jnp.abs(new_state - state_ref_out)))

    # Single-step call (exactly the PyTorch module's forward signature).
    obs1, ns1 = ssm_forward(xs[0], state0, obs_weights, obs_biases, wt, bt)
    jax.block_until_ready((obs1, ns1))
    obs1_ref, ns1_ref = reference_scan(xs[:1], state0, obs_weights, obs_biases, wt, bt)
    assert jnp.allclose(obs1, obs1_ref[0], atol=1e-4, rtol=1e-4)
    assert jnp.allclose(ns1, ns1_ref, atol=1e-4, rtol=1e-4)

    print("KERNEL_OK")
</pallas_src>

<mosaic_0001>
module attributes {stable_mosaic.version = 11 : i64} {
  func.func @kernel(%arg0: i32, %arg1: i32, %arg2: memref<1x8x1xf32, #tpu.memory_space<vmem>>, %arg3: memref<8x128xf32, #tpu.memory_space<vmem>>, %arg4: memref<1x128xf32, #tpu.memory_space<vmem>>, %arg5: memref<1x128xf32, #tpu.memory_space<vmem>>, %arg6: memref<128x128xf32, #tpu.memory_space<vmem>>, %arg7: memref<1x128xf32, #tpu.memory_space<vmem>>, %arg8: memref<128x128xf32, #tpu.memory_space<vmem>>, %arg9: memref<1x128xf32, #tpu.memory_space<vmem>>, %arg10: memref<1x8x128xf32, #tpu.memory_space<vmem>>, %arg11: memref<8x128xf32, #tpu.memory_space<vmem>>) attributes {dimension_semantics = [#tpu.dimension_semantics<parallel>, #tpu.dimension_semantics<arbitrary>], iteration_bounds = array<i64: 1, 8>, scalar_prefetch = 0 : i64, scratch_operands = 1 : i64, tpu.core_type = #tpu.core_type<tc>, window_params = [{transform_indices = @transform_0, window_bounds = array<i64: 1, 8, 1>}, {transform_indices = @transform_1, window_bounds = array<i64: 8, 128>}, {pipeline_mode = #tpu.pipeline_mode<synchronous>, transform_indices = @transform_2, window_bounds = array<i64: 1, 128>}, {pipeline_mode = #tpu.pipeline_mode<synchronous>, transform_indices = @transform_3, window_bounds = array<i64: 1, 128>}, {pipeline_mode = #tpu.pipeline_mode<synchronous>, transform_indices = @transform_4, window_bounds = array<i64: 128, 128>}, {pipeline_mode = #tpu.pipeline_mode<synchronous>, transform_indices = @transform_5, window_bounds = array<i64: 1, 128>}, {pipeline_mode = #tpu.pipeline_mode<synchronous>, transform_indices = @transform_6, window_bounds = array<i64: 128, 128>}, {pipeline_mode = #tpu.pipeline_mode<synchronous>, transform_indices = @transform_7, window_bounds = array<i64: 1, 128>}, {transform_indices = @transform_8, window_bounds = array<i64: 1, 8, 128>}]} {
    %c0_i32 = arith.constant 0 : i32
    %0 = arith.cmpi eq, %arg1, %c0_i32 : i32
    %1 = arith.extui %0 : i1 to i32
    %c0_i32_0 = arith.constant 0 : i32
    %2 = arith.cmpi ne, %1, %c0_i32_0 : i32
    scf.if %2 {
      %c0_29 = arith.constant 0 : index
      %c0_30 = arith.constant 0 : index
      %52 = vector.load %arg3[%c0_29, %c0_30] : memref<8x128xf32, #tpu.memory_space<vmem>>, vector<8x128xf32>
      %c0_31 = arith.constant 0 : index
      %c0_32 = arith.constant 0 : index
      %53 = vector.load %arg11[%c0_31, %c0_32] : memref<8x128xf32, #tpu.memory_space<vmem>>, vector<8x128xf32>
      tpu.vector_store %arg11[%c0_31, %c0_32], %52 {strides = array<i32>} : memref<8x128xf32, #tpu.memory_space<vmem>>, vector<8x128xf32>,
    } else {
    }
    %3 = tpu.iota {dimensions = array<i32: 1>} : vector<1x128xi32>
    %c64_i32 = arith.constant 64 : i32
    %4 = vector.broadcast %c64_i32 : i32 to vector<1x128xi32>
    %5 = arith.cmpi slt, %3, %4 : vector<1x128xi32>
    %c0 = arith.constant 0 : index
    %c0_1 = arith.constant 0 : index
    %c0_2 = arith.constant 0 : index
    %6 = vector.load %arg2[%c0, %c0_1, %c0_2] : memref<1x8x1xf32, #tpu.memory_space<vmem>>, vector<1x8x1xf32>
    %7 = vector.shape_cast %6 : vector<1x8x1xf32> to vector<8x1xf32>
    %c0_3 = arith.constant 0 : index
    %c0_4 = arith.constant 0 : index
    %8 = vector.load %arg4[%c0_3, %c0_4] : memref<1x128xf32, #tpu.memory_space<vmem>>, vector<1x128xf32>
    %c0_5 = arith.constant 0 : index
    %c0_6 = arith.constant 0 : index
    %9 = vector.load %arg5[%c0_5, %c0_6] : memref<1x128xf32, #tpu.memory_space<vmem>>, vector<1x128xf32>
    %10 = vector.broadcast %7 : vector<8x1xf32> to vector<8x128xf32>
    %11 = vector.broadcast %8 : vector<1x128xf32> to vector<8x128xf32>
    %12 = arith.mulf %10, %11 : vector<8x128xf32>
    %13 = vector.broadcast %9 : vector<1x128xf32> to vector<8x128xf32>
    %14 = arith.addf %12, %13 : vector<8x128xf32>
    %cst = arith.constant 5.000000e-01 : f32
    %15 = vector.broadcast %cst : f32 to vector<8x128xf32>
    %16 = arith.mulf %15, %14 : vector<8x128xf32>
    %cst_7 = arith.constant 0.707106769 : f32
    %17 = vector.broadcast %cst_7 : f32 to vector<8x128xf32>
    %18 = arith.mulf %14, %17 : vector<8x128xf32>
    %19 = math.erf %18 : vector<8x128xf32>
    %cst_8 = arith.constant 1.000000e+00 : f32
    %20 = vector.broadcast %cst_8 : f32 to vector<8x128xf32>
    %21 = arith.addf %20, %19 : vector<8x128xf32>
    %22 = arith.mulf %16, %21 : vector<8x128xf32>
    %c0_9 = arith.constant 0 : index
    %c0_10 = arith.constant 0 : index
    %23 = vector.load %arg11[%c0_9, %c0_10] : memref<8x128xf32, #tpu.memory_space<vmem>>, vector<8x128xf32>
    %24 = vector.shape_cast %5 : vector<1x128xi1> to vector<1x128xi1>
    %25 = vector.broadcast %24 : vector<1x128xi1> to vector<8x128xi1>
    %26 = arith.select %25, %22, %23 : vector<8x128xi1>, vector<8x128xf32>
    %c0_11 = arith.constant 0 : index
    %c0_12 = arith.constant 0 : index
    %27 = vector.load %arg6[%c0_11, %c0_12] : memref<128x128xf32, #tpu.memory_space<vmem>>, vector<128x128xf32>
    %c0_13 = arith.constant 0 : index
    %c0_14 = arith.constant 0 : index
    %28 = vector.load %arg7[%c0_13, %c0_14] : memref<1x128xf32, #tpu.memory_space<vmem>>, vector<1x128xf32>
    %cst_15 = arith.constant dense<0.000000e+00> : vector<8x128xf32>
    %29 = tpu.matmul %26, %27, %cst_15 {dimension_numbers = #tpu.dot_dimension_numbers<[1], [0], [0], [1], [0, 0, 1, 1], [], []>} : vector<8x128xf32>, vector<128x128xf32>, vector<8x128xf32> -> vector<8x128xf32>
    %30 = vector.broadcast %28 : vector<1x128xf32> to vector<8x128xf32>
    %31 = arith.addf %29, %30 : vector<8x128xf32>
    %cst_16 = arith.constant 5.000000e-01 : f32
    %32 = vector.broadcast %cst_16 : f32 to vector<8x128xf32>
    %33 = arith.mulf %32, %31 : vector<8x128xf32>
    %cst_17 = arith.constant 0.707106769 : f32
    %34 = vector.broadcast %cst_17 : f32 to vector<8x128xf32>
    %35 = arith.mulf %31, %34 : vector<8x128xf32>
    %36 = math.erf %35 : vector<8x128xf32>
    %cst_18 = arith.constant 1.000000e+00 : f32
    %37 = vector.broadcast %cst_18 : f32 to vector<8x128xf32>
    %38 = arith.addf %37, %36 : vector<8x128xf32>
    %39 = arith.mulf %33, %38 : vector<8x128xf32>
    %40 = vector.shape_cast %5 : vector<1x128xi1> to vector<1x128xi1>
    %41 = vector.broadcast %40 : vector<1x128xi1> to vector<8x128xi1>
    %42 = arith.select %41, %39, %31 : vector<8x128xi1>, vector<8x128xf32>
    %c0_19 = arith.constant 0 : index
    %c0_20 = arith.constant 0 : index
    %43 = vector.load %arg8[%c0_19, %c0_20] : memref<128x128xf32, #tpu.memory_space<vmem>>, vector<128x128xf32>
    %c0_21 = arith.constant 0 : index
    %c0_22 = arith.constant 0 : index
    %44 = vector.load %arg9[%c0_21, %c0_22] : memref<1x128xf32, #tpu.memory_space<vmem>>, vector<1x128xf32>
    %cst_23 = arith.constant dense<0.000000e+00> : vector<8x128xf32>
    %45 = tpu.matmul %42, %43, %cst_23 {dimension_numbers = #tpu.dot_dimension_numbers<[1], [0], [0], [1], [0, 0, 1, 1], [], []>} : vector<8x128xf32>, vector<128x128xf32>, vector<8x128xf32> -> vector<8x128xf32>
    %46 = vector.broadcast %44 : vector<1x128xf32> to vector<8x128xf32>
    %47 = arith.addf %45, %46 : vector<8x128xf32>
    %c0_24 = arith.constant 0 : index
    %c0_25 = arith.constant 0 : index
    %c0_26 = arith.constant 0 : index
    %48 = vector.load %arg10[%c0_24, %c0_25, %c0_26] : memref<1x8x128xf32, #tpu.memory_space<vmem>>, vector<1x8x128xf32>
    %49 = vector.shape_cast %48 : vector<1x8x128xf32> to vector<8x128xf32>
    %50 = vector.shape_cast %47 : vector<8x128xf32> to vector<1x8x128xf32>
    tpu.vector_store %arg10[%c0_24, %c0_25, %c0_26], %50 {strides = array<i32>} : memref<1x8x128xf32, #tpu.memory_space<vmem>>, vector<1x8x128xf32>,
    %c0_27 = arith.constant 0 : index
    %c0_28 = arith.constant 0 : index
    %51 = vector.load %arg11[%c0_27, %c0_28] : memref<8x128xf32, #tpu.memory_space<vmem>>, vector<8x128xf32>
    tpu.vector_store %arg11[%c0_27, %c0_28], %47 {strides = array<i32>} : memref<8x128xf32, #tpu.memory_space<vmem>>, vector<8x128xf32>,
    return
  }
  func.func @transform_0(%arg0: i32, %arg1: i32) -> (i32, i32, i32) {
    %c0_i32 = arith.constant 0 : i32
    %c0_i32_0 = arith.constant 0 : i32
    return %arg1, %arg0, %c0_i32 : i32, i32, i32
  }
  func.func @transform_1(%arg0: i32, %arg1: i32) -> (i32, i32) {
    %c0_i32 = arith.constant 0 : i32
    %c0_i32_0 = arith.constant 0 : i32
    return %arg0, %c0_i32 : i32, i32
  }
  func.func @transform_2(%arg0: i32, %arg1: i32) -> (i32, i32) {
    %c0_i32 = arith.constant 0 : i32
    %c0_i32_0 = arith.constant 0 : i32
    %c0_i32_1 = arith.constant 0 : i32
    return %c0_i32, %c0_i32_0 : i32, i32
  }
  func.func @transform_3(%arg0: i32, %arg1: i32) -> (i32, i32) {
    %c0_i32 = arith.constant 0 : i32
    %c0_i32_0 = arith.constant 0 : i32
    %c0_i32_1 = arith.constant 0 : i32
    return %c0_i32, %c0_i32_0 : i32, i32
  }
  func.func @transform_4(%arg0: i32, %arg1: i32) -> (i32, i32) {
    %c0_i32 = arith.constant 0 : i32
    %c0_i32_0 = arith.constant 0 : i32
    %c0_i32_1 = arith.constant 0 : i32
    return %c0_i32, %c0_i32_0 : i32, i32
  }
  func.func @transform_5(%arg0: i32, %arg1: i32) -> (i32, i32) {
    %c0_i32 = arith.constant 0 : i32
    %c0_i32_0 = arith.constant 0 : i32
    %c0_i32_1 = arith.constant 0 : i32
    return %c0_i32, %c0_i32_0 : i32, i32
  }
  func.func @transform_6(%arg0: i32, %arg1: i32) -> (i32, i32) {
    %c0_i32 = arith.constant 0 : i32
    %c0_i32_0 = arith.constant 0 : i32
    %c0_i32_1 = arith.constant 0 : i32
    return %c0_i32, %c0_i32_0 : i32, i32
  }
  func.func @transform_7(%arg0: i32, %arg1: i32) -> (i32, i32) {
    %c0_i32 = arith.constant 0 : i32
    %c0_i32_0 = arith.constant 0 : i32
    %c0_i32_1 = arith.constant 0 : i32
    return %c0_i32, %c0_i32_0 : i32, i32
  }
  func.func @transform_8(%arg0: i32, %arg1: i32) -> (i32, i32, i32) {
    %c0_i32 = arith.constant 0 : i32
    %c0_i32_0 = arith.constant 0 : i32
    return %arg1, %arg0, %c0_i32 : i32, i32, i32
  }
}

</mosaic_0001>

<llo_original>
// kernel: tpu_custom_call.1
$region0: #{tpu_custom_call.1}
  #allocation0 [shape = 'u32[]', space=smem, size = 0x4, offset = 0x4, fixed_abs, tag = 'smem constant byte address 0x4 - core index']
  #allocation1 [shape = 'u32[144,128]{1,0:T(1,128)}', space=vmem, size = 0x12000, scoped, tag = 'internal scratch']
  #allocation2 [shape = 'f32[8,128]{1,0:T(8,128)}', space=vmem, size = 0x1000, scoped, tag = 'scratch operand']
  %s0 = inlined_call_operand.vmem [shape: f32[8,8,1], index: 0, kind: input, shape index: {}]
  %s1 = inlined_call_operand.vmem [shape: f32[8,128], index: 1, kind: input, shape index: {}]
  %s2 = inlined_call_operand.vmem [shape: f32[1,128], index: 2, kind: input, shape index: {}]
  %s3 = inlined_call_operand.vmem [shape: f32[1,128], index: 3, kind: input, shape index: {}]
  %s4 = inlined_call_operand.hbm [shape: f32[128,128], index: 4, kind: input, shape index: {}]
  %s5 = inlined_call_operand.vmem [shape: f32[1,128], index: 5, kind: input, shape index: {}]
  %s6 = inlined_call_operand.hbm [shape: f32[128,128], index: 6, kind: input, shape index: {}]
  %s7 = inlined_call_operand.vmem [shape: f32[1,128], index: 7, kind: input, shape index: {}]
  %s8 = inlined_call_operand.hbm [shape: f32[8,8,128], index: 8, kind: output, shape index: {}]
  %s9 = sld [smem:[#allocation0]]
  $region77: #{tpu_custom_call.1} parent=0
    _
  %s11 = ssub.s32 1, %s9
  %s12 = scalar_select 0, %s11, %s9
  $region1: #{tpu_custom_call.1} parent=0
    #allocation3 [shape = 'u8[65536]{0}', space=vmem, size = 0x10000, scoped, tag = 'input window, operand 4, single buffered']
    #allocation4 [shape = 's32[2]{0}', space=sflag, size = 0x8, scoped, tag = 'scoped memory for tpu_custom_call.1']
    #allocation5 [shape = 's32[2]{0}', space=sflag, size = 0x8, scoped, tag = 'scoped memory for tpu_custom_call.1']
    #allocation6 [shape = 'u8[65536]{0}', space=vmem, size = 0x10000, scoped, tag = 'input window, operand 6, single buffered']
    #allocation7 [shape = 's32[1]{0}', space=sflag, size = 0x4, scoped, tag = 'scoped memory for tpu_custom_call.1']
    #allocation8 [shape = 'u8[8192]{0}', space=vmem, size = 0x2000, scoped, tag = 'output window, operand 0']
    %13 = vsyncpa [#allocation4], 0
    %14 = vsyncpa [#allocation7], 0
    %15 = vsyncpa [#allocation5], 0
    %s16 = scalar_lea.sflag [#allocation5], 1
    %17 = vsyncpa %s16, 0
    loop: start=0, step=1, limit=10
    $region2: #{tpu_custom_call.1} parent=1 // loop_pre_header
      _
    $region3: #{tpu_custom_call.1} parent=1 // loop_header
      %s19 = sphi 0, %s23
      %p20 = scmp.ge.s32.totalorder %s19, 10
      %s26 = sphi 0, %s38
      %s27 = sphi 0, %s34
      %s28 = sphi 0, %s26
      %s29 = sphi 0, %s27
      %s30 = sphi 0, %s28
      %s31 = sphi 0, %s29
      %s43 = sphi 0, %s45
      %s46 = sphi 0, %s43
      %s47 = sphi 0, %s46
      %s63 = sphi 0, %s47
      %s69 = sphi 0, %s71
      %s72 = sphi 0, %s69
      %s73 = sphi 0, %s72
      %s89 = sphi 0, %s73
      %s93 = sphi 0, %s93
      %s95 = sphi 0, %s93
      %s96 = sphi 0, %s95
      %s110 = sphi 0, %s96
      %s114 = sphi 0, %s114
      %s116 = sphi 0, %s114
      %s117 = sphi 0, %s116
      %s131 = sphi 0, %s117
      %s135 = sphi 0, %s135
      %s137 = sphi 0, %s135
      %s138 = sphi 0, %s137
      %s152 = sphi 0, %s138
      %s156 = sphi 0, %s156
      %s158 = sphi 0, %s156
      %s159 = sphi 0, %s158
      %s173 = sphi 0, %s159
      %s177 = sphi 0, %s177
      %s179 = sphi 0, %s177
      %s180 = sphi 0, %s179
      %s194 = sphi 0, %s180
      %s198 = sphi 0, %s198
      %s200 = sphi 0, %s198
      %s201 = sphi 0, %s200
      %s215 = sphi 0, %s201
      %s223 = sphi 0, %s225
      %s226 = sphi 0, %s223
      %s227 = sphi 0, %s226
      %s243 = sphi 0, %s227
    $region4: #{tpu_custom_call.1} parent=1 // loop_header_branch
      %22 = sbr.rel (%p20) target = $region8
    $region5: #{tpu_custom_call.1} parent=1 // loop_body
      %s24 = ssub.s32 %s19, 1
      %s25 = ssub.s32 %s19, 2
      %s32 = sadd.s32 1, %s27
      %p33 = scmp.ge.s32.totalorder %s32, 8
      %s34 = scalar_select %p33, 0, %s32
      %s35 = sadd.s32 1, %s26
      %s36 = scalar_select %p33, %s35, %s26
      %p37 = scmp.ge.s32.totalorder %s36, 1
      %s38 = scalar_select %p37, 0, %s36
      %s39 = ssub.s32 %s27, %s34
      %s40 = ssub.s32 %s26, %s38
      %s41 = sor.u32 %s39, %s40
      %p42 = scmp.eq.s32.totalorder %s41, 0
      %s44 = sadd.s32 %s43, 1
      %s45 = scalar_select %p42, %s43, %s44
      %p48 = pneg %p42
      %p49 = scmp.eq.s32.totalorder %s19, 7
      %p50 = por %p48, %p49
      %p51 = scmp.ne.s32.totalorder %s43, %s46
      %p52 = scmp.eq.s32.totalorder %s19, 0
      %p53 = por %p51, %p52
      %p54 = scmp.ne.s32.totalorder %s43, %s46
      %p55 = scmp.eq.s32.totalorder %s24, 7
      %p56 = por %p54, %p55
      %p57 = scmp.ne.s32.totalorder %s46, %s47
      %p58 = scmp.eq.s32.totalorder %s24, 0
      %p59 = por %p57, %p58
      %p60 = scmp.ne.s32.totalorder %s46, %s47
      %p61 = scmp.eq.s32.totalorder %s25, 7
      %p62 = por %p60, %p61
      %p64 = scmp.ne.s32.totalorder %s47, %s63
      %p65 = scmp.eq.s32.totalorder %s25, 0
      %p66 = por %p64, %p65
      %s67 = ssub.s32 %s26, %s38
      %p68 = scmp.eq.s32.totalorder %s67, 0
      %s70 = sadd.s32 %s69, 1
      %s71 = scalar_select %p68, %s69, %s70
      %p74 = pneg %p68
      %p75 = scmp.eq.s32.totalorder %s19, 7
      %p76 = por %p74, %p75
      %p77 = scmp.ne.s32.totalorder %s69, %s72
      %p78 = scmp.eq.s32.totalorder %s19, 0
      %p79 = por %p77, %p78
      %p80 = scmp.ne.s32.totalorder %s69, %s72
      %p81 = scmp.eq.s32.totalorder %s24, 7
      %p82 = por %p80, %p81
      %p83 = scmp.ne.s32.totalorder %s72, %s73
      %p84 = scmp.eq.s32.totalorder %s24, 0
      %p85 = por %p83, %p84
      %p86 = scmp.ne.s32.totalorder %s72, %s73
      %p87 = scmp.eq.s32.totalorder %s25, 7
      %p88 = por %p86, %p87
      %p90 = scmp.ne.s32.totalorder %s73, %s89
      %p91 = scmp.eq.s32.totalorder %s25, 0
      %p92 = por %p90, %p91
      %s94 = sadd.s32 %s93, 1
      %p97 = scmp.eq.s32.totalorder %s19, 7
      %p98 = scmp.ne.s32.totalorder %s93, %s95
      %p99 = scmp.eq.s32.totalorder %s19, 0
      %p100 = por %p98, %p99
      %p101 = scmp.ne.s32.totalorder %s93, %s95
      %p102 = scmp.eq.s32.totalorder %s24, 7
      %p103 = por %p101, %p102
      %p104 = scmp.ne.s32.totalorder %s95, %s96
      %p105 = scmp.eq.s32.totalorder %s24, 0
      %p106 = por %p104, %p105
      %p107 = scmp.ne.s32.totalorder %s95, %s96
      %p108 = scmp.eq.s32.totalorder %s25, 7
      %p109 = por %p107, %p108
      %p111 = scmp.ne.s32.totalorder %s96, %s110
      %p112 = scmp.eq.s32.totalorder %s25, 0
      %p113 = por %p111, %p112
      %s115 = sadd.s32 %s114, 1
      %p118 = scmp.eq.s32.totalorder %s19, 7
      %p119 = scmp.ne.s32.totalorder %s114, %s116
      %p120 = scmp.eq.s32.totalorder %s19, 0
      %p121 = por %p119, %p120
      %p122 = scmp.ne.s32.totalorder %s114, %s116
      %p123 = scmp.eq.s32.totalorder %s24, 7
      %p124 = por %p122, %p123
      %p125 = scmp.ne.s32.totalorder %s116, %s117
      %p126 = scmp.eq.s32.totalorder %s24, 0
      %p127 = por %p125, %p126
      %p128 = scmp.ne.s32.totalorder %s116, %s117
      %p129 = scmp.eq.s32.totalorder %s25, 7
      %p130 = por %p128, %p129
      %p132 = scmp.ne.s32.totalorder %s117, %s131
      %p133 = scmp.eq.s32.totalorder %s25, 0
      %p134 = por %p132, %p133
      %s136 = sadd.s32 %s135, 1
      %p139 = scmp.eq.s32.totalorder %s19, 7
      %p140 = scmp.ne.s32.totalorder %s135, %s137
      %p141 = scmp.eq.s32.totalorder %s19, 0
      %p142 = por %p140, %p141
      %p143 = scmp.ne.s32.totalorder %s135, %s137
      %p144 = scmp.eq.s32.totalorder %s24, 7
      %p145 = por %p143, %p144
      %p146 = scmp.ne.s32.totalorder %s137, %s138
      %p147 = scmp.eq.s32.totalorder %s24, 0
      %p148 = por %p146, %p147
      %p149 = scmp.ne.s32.totalorder %s137, %s138
      %p150 = scmp.eq.s32.totalorder %s25, 7
      %p151 = por %p149, %p150
      %p153 = scmp.ne.s32.totalorder %s138, %s152
      %p154 = scmp.eq.s32.totalorder %s25, 0
      %p155 = por %p153, %p154
      %s157 = sadd.s32 %s156, 1
      %p160 = scmp.eq.s32.totalorder %s19, 7
      %p161 = scmp.ne.s32.totalorder %s156, %s158
      %p162 = scmp.eq.s32.totalorder %s19, 0
      %p163 = por %p161, %p162
      %p164 = scmp.ne.s32.totalorder %s156, %s158
      %p165 = scmp.eq.s32.totalorder %s24, 7
      %p166 = por %p164, %p165
      %p167 = scmp.ne.s32.totalorder %s158, %s159
      %p168 = scmp.eq.s32.totalorder %s24, 0
      %p169 = por %p167, %p168
      %p170 = scmp.ne.s32.totalorder %s158, %s159
      %p171 = scmp.eq.s32.totalorder %s25, 7
      %p172 = por %p170, %p171
      %p174 = scmp.ne.s32.totalorder %s159, %s173
      %p175 = scmp.eq.s32.totalorder %s25, 0
      %p176 = por %p174, %p175
      %s178 = sadd.s32 %s177, 1
      %p181 = scmp.eq.s32.totalorder %s19, 7
      %p182 = scmp.ne.s32.totalorder %s177, %s179
      %p183 = scmp.eq.s32.totalorder %s19, 0
      %p184 = por %p182, %p183
      %p185 = scmp.ne.s32.totalorder %s177, %s179
      %p186 = scmp.eq.s32.totalorder %s24, 7
      %p187 = por %p185, %p186
      %p188 = scmp.ne.s32.totalorder %s179, %s180
      %p189 = scmp.eq.s32.totalorder %s24, 0
      %p190 = por %p188, %p189
      %p191 = scmp.ne.s32.totalorder %s179, %s180
      %p192 = scmp.eq.s32.totalorder %s25, 7
      %p193 = por %p191, %p192
      %p195 = scmp.ne.s32.totalorder %s180, %s194
      %p196 = scmp.eq.s32.totalorder %s25, 0
      %p197 = por %p195, %p196
      %s199 = sadd.s32 %s198, 1
      %p202 = scmp.eq.s32.totalorder %s19, 7
      %p203 = scmp.ne.s32.totalorder %s198, %s200
      %p204 = scmp.eq.s32.totalorder %s19, 0
      %p205 = por %p203, %p204
      %p206 = scmp.ne.s32.totalorder %s198, %s200
      %p207 = scmp.eq.s32.totalorder %s24, 7
      %p208 = por %p206, %p207
      %p209 = scmp.ne.s32.totalorder %s200, %s201
      %p210 = scmp.eq.s32.totalorder %s24, 0
      %p211 = por %p209, %p210
      %p212 = scmp.ne.s32.totalorder %s200, %s201
      %p213 = scmp.eq.s32.totalorder %s25, 7
      %p214 = por %p212, %p213
      %p216 = scmp.ne.s32.totalorder %s201, %s215
      %p217 = scmp.eq.s32.totalorder %s25, 0
      %p218 = por %p216, %p217
      %s219 = ssub.s32 %s27, %s34
      %s220 = ssub.s32 %s26, %s38
      %s221 = sor.u32 %s219, %s220
      %p222 = scmp.eq.s32.totalorder %s221, 0
      %s224 = sadd.s32 %s223, 1
      %s225 = scalar_select %p222, %s223, %s224
      %p228 = pneg %p222
      %p229 = scmp.eq.s32.totalorder %s19, 7
      %p230 = por %p228, %p229
      %p231 = scmp.ne.s32.totalorder %s223, %s226
      %p232 = scmp.eq.s32.totalorder %s19, 0
      %p233 = por %p231, %p232
      %p234 = scmp.ne.s32.totalorder %s223, %s226
      %p235 = scmp.eq.s32.totalorder %s24, 7
      %p236 = por %p234, %p235
      %p237 = scmp.ne.s32.totalorder %s226, %s227
      %p238 = scmp.eq.s32.totalorder %s24, 0
      %p239 = por %p237, %p238
      %p240 = scmp.ne.s32.totalorder %s226, %s227
      %p241 = scmp.eq.s32.totalorder %s25, 7
      %p242 = por %p240, %p241
      %p244 = scmp.ne.s32.totalorder %s227, %s243
      %p245 = scmp.eq.s32.totalorder %s25, 0
      %p246 = por %p244, %p245
      %p247 = scmp.le.s32.totalorder 1, %s19
      %p248 = scmp.lt.s32.totalorder %s19, 9
      %p249 = pnand %p247, %p248
      %p250 = pneg %p249
      // Predicated region
      $region9: #{tpu_custom_call.1} parent=5 // pred_check
        _
      $region10: #{tpu_custom_call.1} parent=5 // pred_check_branch
        %252 = sbr.rel (%p249) target = $region12
      $region11: #{tpu_custom_call.1} parent=5 // pred_region
        %s253 = ssub.s32 %s19, 1
        // Predicated region
        $region13: #{tpu_custom_call.1} parent=11 // pred_check
          %p254 = pneg %p85
        $region14: #{tpu_custom_call.1} parent=11 // pred_check_branch
          %256 = sbr.rel (%p254) target = $region16
        $region15: #{tpu_custom_call.1} parent=11 // pred_region
          %p257 = scmp.lt.s32.totalorder %s28, 0
          %s258 = scalar_select %p257, %s28, 0
          %s259 = smul.addr %s258, 8
          %s260 = scalar_lea.vmem %s1, %s259
        $region16: #{tpu_custom_call.1} parent=11 // pred_fallthru
          _
        // Predicated region
        $region17: #{tpu_custom_call.1} parent=11 // pred_check
          %p261 = pneg %p106
        $region18: #{tpu_custom_call.1} parent=11 // pred_check_branch
          %263 = sbr.rel (%p261) target = $region20
        $region19: #{tpu_custom_call.1} parent=11 // pred_region
          _
        $region20: #{tpu_custom_call.1} parent=11 // pred_fallthru
          _
        // Predicated region
        $region21: #{tpu_custom_call.1} parent=11 // pred_check
          %p264 = pneg %p127
        $region22: #{tpu_custom_call.1} parent=11 // pred_check_branch
          %266 = sbr.rel (%p264) target = $region24
        $region23: #{tpu_custom_call.1} parent=11 // pred_region
          _
        $region24: #{tpu_custom_call.1} parent=11 // pred_fallthru
          _
        // Predicated region
        $region25: #{tpu_custom_call.1} parent=11 // pred_check
          %p267 = pneg %p148
        $region26: #{tpu_custom_call.1} parent=11 // pred_check_branch
          %269 = sbr.rel (%p267) target = $region28
        $region27: #{tpu_custom_call.1} parent=11 // pred_region
          %s271 = ssub.s32 2048, 2048
          %272 = vsyncadd [#allocation4], %s271
          %s273 = sshll.u32 [#allocation3], 4
          %s274 = int_to_ptr.vmem [resolvable:$true] %s273
          %279 = dma.hbm_to_vmem [thread:$0]  %s4, 2048, %s274, [#allocation4], 128, 128, 8
        $region28: #{tpu_custom_call.1} parent=11 // pred_fallthru
          _
        // Predicated region
        $region29: #{tpu_custom_call.1} parent=11 // pred_check
          %p280 = pneg %p169
        $region30: #{tpu_custom_call.1} parent=11 // pred_check_branch
          %282 = sbr.rel (%p280) target = $region32
        $region31: #{tpu_custom_call.1} parent=11 // pred_region
          _
        $region32: #{tpu_custom_call.1} parent=11 // pred_fallthru
          _
        // Predicated region
        $region33: #{tpu_custom_call.1} parent=11 // pred_check
          %p283 = pneg %p190
        $region34: #{tpu_custom_call.1} parent=11 // pred_check_branch
          %285 = sbr.rel (%p283) target = $region36
        $region35: #{tpu_custom_call.1} parent=11 // pred_region
          %s287 = ssub.s32 2048, 2048
          %288 = vsyncadd [#allocation7], %s287
          %s289 = sshll.u32 [#allocation6], 4
          %s290 = int_to_ptr.vmem [resolvable:$true] %s289
          %295 = dma.hbm_to_vmem [thread:$0]  %s6, 2048, %s290, [#allocation7], 128, 128, 8
        $region36: #{tpu_custom_call.1} parent=11 // pred_fallthru
          _
        // Predicated region
        $region37: #{tpu_custom_call.1} parent=11 // pred_check
          %p296 = pneg %p211
        $region38: #{tpu_custom_call.1} parent=11 // pred_check_branch
          %298 = sbr.rel (%p296) target = $region40
        $region39: #{tpu_custom_call.1} parent=11 // pred_region
          _
        $region40: #{tpu_custom_call.1} parent=11 // pred_fallthru
          _
      $region12: #{tpu_custom_call.1} parent=5 // pred_fallthru
        _
      %p299 = scmp.lt.s32.totalorder %s19, 8
      // Predicated region
      $region41: #{tpu_custom_call.1} parent=5 // pred_check
        %p300 = pneg %p299
      $region42: #{tpu_custom_call.1} parent=5 // pred_check_branch
        %302 = sbr.rel (%p300) target = $region44
      $region43: #{tpu_custom_call.1} parent=5 // pred_region
        // Predicated region
        $region45: #{tpu_custom_call.1} parent=43 // pred_check
          %p303 = pneg %p53
        $region46: #{tpu_custom_call.1} parent=43 // pred_check_branch
          %305 = sbr.rel (%p303) target = $region48
        $region47: #{tpu_custom_call.1} parent=43 // pred_region
          %p306 = scmp.lt.s32.totalorder %s27, 7
          %s307 = scalar_select %p306, %s27, 7
          %p308 = scmp.lt.s32.totalorder %s26, 0
          %s309 = scalar_select %p308, %s26, 0
          %s310 = sadd.s32 %s309, %s307
          %s311 = smul.addr %s310, 8
          %s312 = scalar_lea.vmem %s0, %s311
        $region48: #{tpu_custom_call.1} parent=43 // pred_fallthru
          _
      $region44: #{tpu_custom_call.1} parent=5 // pred_fallthru
        _
      %p313 = scmp.le.s32.totalorder 1, %s19
      %p314 = scmp.lt.s32.totalorder %s19, 9
      %p315 = pnand %p313, %p314
      %p316 = pneg %p315
      // Predicated region
      $region49: #{tpu_custom_call.1} parent=5 // pred_check
        _
      $region50: #{tpu_custom_call.1} parent=5 // pred_check_branch
        %318 = sbr.rel (%p315) target = $region52
      $region51: #{tpu_custom_call.1} parent=5 // pred_region
        %s319 = ssub.s32 %s19, 1
        // Predicated region
        $region53: #{tpu_custom_call.1} parent=51 // pred_check
          %p320 = pneg %p148
        $region54: #{tpu_custom_call.1} parent=51 // pred_check_branch
          %322 = sbr.rel (%p320) target = $region56
        $region55: #{tpu_custom_call.1} parent=51 // pred_region
          %323 = dma.done [#allocation4], 2048
        $region56: #{tpu_custom_call.1} parent=51 // pred_fallthru
          _
        // Predicated region
        $region57: #{tpu_custom_call.1} parent=51 // pred_check
          %p324 = pneg %p190
        $region58: #{tpu_custom_call.1} parent=51 // pred_check_branch
          %326 = sbr.rel (%p324) target = $region60
        $region59: #{tpu_custom_call.1} parent=51 // pred_region
          %327 = dma.done [#allocation7], 2048
        $region60: #{tpu_custom_call.1} parent=51 // pred_fallthru
          _
        %p328 = scmp.lt.s32.totalorder %s29, 7
        %s329 = scalar_select %p328, %s29, 7
        %p330 = scmp.lt.s32.totalorder %s28, 0
        %s331 = scalar_select %p330, %s28, 0
        %s332 = sadd.s32 %s331, %s329
        %s333 = smul.addr %s332, 8
        %s334 = scalar_lea.vmem %s0, %s333
        %p335 = pneg %p59
        %p336 = pneg %p56
        %p337 = scmp.lt.s32.totalorder %s28, 0
        %s338 = scalar_select %p337, %s28, 0
        %s339 = smul.addr %s338, 8
        %s340 = scalar_lea.vmem %s1, %s339
        %p341 = pneg %p85
        %p342 = pneg %p82
        %p343 = pneg %p106
        %p344 = pneg %p103
        %p345 = pneg %p127
        %p346 = pneg %p124
        %p347 = pneg %p148
        %p348 = pneg %p145
        %p349 = pneg %p169
        %p350 = pneg %p166
        %p351 = pneg %p190
        %p352 = pneg %p187
        %p353 = pneg %p211
        %p354 = pneg %p208
        %p355 = pneg %p239
        %p356 = pneg %p236
        %s357 = sand.u32 %s226, 1
        %s358 = scalar_lea.sflag [#allocation5], %s357
        %s359 = sand.u32 %s226, 1
        %s360 = smul.addr %s359, 8
        %s361 = scalar_lea.vmem [#allocation8], %s360
        %p362 = scmp.lt.s32.totalorder %s29, 7
        %s363 = scalar_select %p362, %s29, 7
        %p364 = scmp.lt.s32.totalorder %s28, 0
        %s365 = scalar_select %p364, %s28, 0
        %s366 = sadd.s32 %s365, %s363
        %s367 = smul.addr %s366, 8
        %s368 = scalar_lea.vmem %s0, %s367
        %p369 = scmp.lt.s32.totalorder %s28, 0
        %s370 = scalar_select %p369, %s28, 0
        %s371 = smul.addr %s370, 8
        %s372 = scalar_lea.vmem %s1, %s371
        %p373 = scmp.eq.s32.totalorder %s29, 0
        // Predicated region
        $region61: #{tpu_custom_call.1} parent=51 // pred_check
          %p374 = pneg %p373
        $region62: #{tpu_custom_call.1} parent=51 // pred_check_branch
          %376 = sbr.rel (%p374) target = $region64
        $region63: #{tpu_custom_call.1} parent=51 // pred_region
          %v377 = vld [vmem:[%s372] sm:$0xff]
          %378 = vst [vmem:[#allocation2] sm:$0xff] %v377
        $region64: #{tpu_custom_call.1} parent=51 // pred_fallthru
          _
        %v379 = vlaneseq
        %v380 = vand.u32 %v379, 127
        %vm381 = vcmp.lt.s32.totalorder %v380, 64
        %v382 = vld [vmem:[%s368] sm:$0xff]
        %v383 = vld [vmem:[%s2] sm:$0x1]
        %v384 = vld [vmem:[%s3] sm:$0x1]
        %386 = vset.pattern.permute.xlu0 0
        %387 = vperm.xlu0 %386, %v382
        %v388 = vpop.permute.xlu0 %387
        %v391 = vlaneseq
        %v392 = vshrl.u32 %v391, 7
        %v393 = vsub.s32 0, %v392
        %v394 = vrot.slane %v383, %v393
        %v396 = vmul.f32 %v388, %v394
        %v398 = vlaneseq
        %v399 = vshrl.u32 %v398, 7
        %v400 = vsub.s32 0, %v399
        %v401 = vrot.slane %v384, %v400
        %v403 = vadd.f32 %v396, %v401
        %v404 = vmul.f32 %v403, 0.5
        %v405 = vmul.f32 %v403, 0.70710677
        %v406 = verf.f32.pop %v405
        %v407 = vadd.f32 %v406, 1.0
        %v408 = vmul.f32 %v404, %v407
        %v409 = vld [vmem:[#allocation2] sm:$0xff]
        %v410 = vsel %vm381, 1, 0
        %vm411 = vcmp.eq.s32.totalorder %v410, 1
        %v412 = vsel %vm411, %v408, %v409
        %v413 = vld [vmem:[#allocation3] sm:$0xff]
        %v414 = vld [vmem:[#allocation3 + $0x8] sm:$0xff]
        %v415 = vld [vmem:[#allocation3 + $0x10] sm:$0xff]
        %v416 = vld [vmem:[#allocation3 + $0x18] sm:$0xff]
        %v417 = vld [vmem:[#allocation3 + $0x20] sm:$0xff]
        %v418 = vld [vmem:[#allocation3 + $0x28] sm:$0xff]
        %v419 = vld [vmem:[#allocation3 + $0x30] sm:$0xff]
        %v420 = vld [vmem:[#allocation3 + $0x38] sm:$0xff]
        %v421 = vld [vmem:[#allocation3 + $0x40] sm:$0xff]
        %v422 = vld [vmem:[#allocation3 + $0x48] sm:$0xff]
        %v423 = vld [vmem:[#allocation3 + $0x50] sm:$0xff]
        %v424 = vld [vmem:[#allocation3 + $0x58] sm:$0xff]
        %v425 = vld [vmem:[#allocation3 + $0x60] sm:$0xff]
        %v426 = vld [vmem:[#allocation3 + $0x68] sm:$0xff]
        %v427 = vld [vmem:[#allocation3 + $0x70] sm:$0xff]
        %v428 = vld [vmem:[#allocation3 + $0x78] sm:$0xff]
        %v429 = vld [vmem:[%s5] sm:$0x1]
        %v431 = vlaneseq
        %v432 = vshrl.u32 %v431, 7
        %v433 = vsub.s32 0, %v432
        %v434 = vrot.slane %v429, %v433
        %436 = vmatprep.subr.mxu0 0.0
        %437 = vmatpush1.msra.mxu0 %v413
        %438 = vmatprep.subr.mxu0 0.0
        %439 = vmatpush1.msra.mxu0 %v414
        %440 = vmatprep.subr.mxu0 0.0
        %441 = vmatpush1.msra.mxu0 %v415
        %442 = vmatprep.subr.mxu0 0.0
        %443 = vmatpush1.msra.mxu0 %v416
        %444 = vmatprep.subr.mxu0 0.0
        %445 = vmatpush1.msra.mxu0 %v417
        %446 = vmatprep.subr.mxu0 0.0
        %447 = vmatpush1.msra.mxu0 %v418
        %448 = vmatprep.subr.mxu0 0.0
        %449 = vmatpush1.msra.mxu0 %v419
        %450 = vmatprep.subr.mxu0 0.0
        %451 = vmatpush1.msra.mxu0 %v420
        %452 = vmatprep.subr.mxu0 0.0
        %453 = vmatpush1.msra.mxu0 %v421
        %454 = vmatprep.subr.mxu0 0.0
        %455 = vmatpush1.msra.mxu0 %v422
        %456 = vmatprep.subr.mxu0 0.0
        %457 = vmatpush1.msra.mxu0 %v423
        %458 = vmatprep.subr.mxu0 0.0
        %459 = vmatpush1.msra.mxu0 %v424
        %460 = vmatprep.subr.mxu0 0.0
        %461 = vmatpush1.msra.mxu0 %v425
        %462 = vmatprep.subr.mxu0 0.0
        %463 = vmatpush1.msra.mxu0 %v426
        %464 = vmatprep.subr.mxu0 0.0
        %465 = vmatpush1.msra.mxu0 %v427
        %466 = vmatprep.subr.mxu0 0.0
        %467 = vmatpush1.msra.mxu0 %v428
        %468 = vmatprep.subr.mxu0 0.0
        %469 = vmatpush1.msra.mxu0 0.0
        %470 = vmatprep.subr.mxu0 0.0
        %471 = vmatpush1.msra.mxu0 0.0
        %472 = vmatprep.subr.mxu0 0.0
        %473 = vmatpush1.msra.mxu0 0.0
        %474 = vmatprep.subr.mxu0 0.0
        %475 = vmatpush1.msra.mxu0 0.0
        %476 = vmatprep.subr.mxu0 0.0
        %477 = vmatpush1.msra.mxu0 0.0
        %478 = vmatprep.subr.mxu0 0.0
        %479 = vmatpush1.msra.mxu0 0.0
        %480 = vmatprep.subr.mxu0 0.0
        %481 = vmatpush1.msra.mxu0 0.0
        %482 = vmatprep.subr.mxu0 0.0
        %483 = vmatpush1.msra.mxu0 0.0
        %484 = vmatprep.subr.mxu0 0.0
        %485 = vmatpush1.msra.mxu0 0.0
        %486 = vmatprep.subr.mxu0 0.0
        %487 = vmatpush1.msra.mxu0 0.0
        %488 = vmatprep.subr.mxu0 0.0
        %489 = vmatpush1.msra.mxu0 0.0
        %490 = vmatprep.subr.mxu0 0.0
        %491 = vmatpush1.msra.mxu0 0.0
        %492 = vmatprep.subr.mxu0 0.0
        %493 = vmatpush1.msra.mxu0 0.0
        %494 = vmatprep.subr.mxu0 0.0
        %495 = vmatpush1.msra.mxu0 0.0
        %496 = vmatprep.subr.mxu0 0.0
        %497 = vmatpush1.msra.mxu0 0.0
        %498 = vmatprep.subr.mxu0 0.0
        %499 = vmatpush1.msra.mxu0 0.0
        %500 = vmatprep.mubr.f32.mxu0 0.0
        %501 = vmatmul.mubr.f32.gmra.mrb[0].mxu0 %v412
        %v502 = vpop.f32.mrb[0].mxu0
        %v503 = vadd.f32 %v434, %v502
        %v504 = vpop.f32.mrb[0].mxu0
        %505 = vdwg.mxu0
        %v506 = vmul.f32 %v503, 0.5
        %v507 = vmul.f32 %v503, 0.70710677
        %v508 = verf.f32.pop %v507
        %v509 = vadd.f32 %v508, 1.0
        %v510 = vmul.f32 %v506, %v509
        %v511 = vsel %vm411, %v510, %v503
        %v512 = vld [vmem:[#allocation6] sm:$0xff]
        %v513 = vld [vmem:[#allocation6 + $0x8] sm:$0xff]
        %v514 = vld [vmem:[#allocation6 + $0x10] sm:$0xff]
        %v515 = vld [vmem:[#allocation6 + $0x18] sm:$0xff]
        %v516 = vld [vmem:[#allocation6 + $0x20] sm:$0xff]
        %v517 = vld [vmem:[#allocation6 + $0x28] sm:$0xff]
        %v518 = vld [vmem:[#allocation6 + $0x30] sm:$0xff]
        %v519 = vld [vmem:[#allocation6 + $0x38] sm:$0xff]
        %v520 = vld [vmem:[#allocation6 + $0x40] sm:$0xff]
        %v521 = vld [vmem:[#allocation6 + $0x48] sm:$0xff]
        %v522 = vld [vmem:[#allocation6 + $0x50] sm:$0xff]
        %v523 = vld [vmem:[#allocation6 + $0x58] sm:$0xff]
        %v524 = vld [vmem:[#allocation6 + $0x60] sm:$0xff]
        %v525 = vld [vmem:[#allocation6 + $0x68] sm:$0xff]
        %v526 = vld [vmem:[#allocation6 + $0x70] sm:$0xff]
        %v527 = vld [vmem:[#allocation6 + $0x78] sm:$0xff]
        %v528 = vld [vmem:[%s7] sm:$0x1]
        %v530 = vlaneseq
        %v531 = vshrl.u32 %v530, 7
        %v532 = vsub.s32 0, %v531
        %v533 = vrot.slane %v528, %v532
        %535 = vmatprep.subr.mxu0 0.0
        %536 = vmatpush1.msra.mxu0 %v512
        %537 = vmatprep.subr.mxu0 0.0
        %538 = vmatpush1.msra.mxu0 %v513
        %539 = vmatprep.subr.mxu0 0.0
        %540 = vmatpush1.msra.mxu0 %v514
        %541 = vmatprep.subr.mxu0 0.0
        %542 = vmatpush1.msra.mxu0 %v515
        %543 = vmatprep.subr.mxu0 0.0
        %544 = vmatpush1.msra.mxu0 %v516
        %545 = vmatprep.subr.mxu0 0.0
        %546 = vmatpush1.msra.mxu0 %v517
        %547 = vmatprep.subr.mxu0 0.0
        %548 = vmatpush1.msra.mxu0 %v518
        %549 = vmatprep.subr.mxu0 0.0
        %550 = vmatpush1.msra.mxu0 %v519
        %551 = vmatprep.subr.mxu0 0.0
        %552 = vmatpush1.msra.mxu0 %v520
        %553 = vmatprep.subr.mxu0 0.0
        %554 = vmatpush1.msra.mxu0 %v521
        %555 = vmatprep.subr.mxu0 0.0
        %556 = vmatpush1.msra.mxu0 %v522
        %557 = vmatprep.subr.mxu0 0.0
        %558 = vmatpush1.msra.mxu0 %v523
        %559 = vmatprep.subr.mxu0 0.0
        %560 = vmatpush1.msra.mxu0 %v524
        %561 = vmatprep.subr.mxu0 0.0
        %562 = vmatpush1.msra.mxu0 %v525
        %563 = vmatprep.subr.mxu0 0.0
        %564 = vmatpush1.msra.mxu0 %v526
        %565 = vmatprep.subr.mxu0 0.0
        %566 = vmatpush1.msra.mxu0 %v527
        %567 = vmatprep.subr.mxu0 0.0
        %568 = vmatpush1.msra.mxu0 0.0
        %569 = vmatprep.subr.mxu0 0.0
        %570 = vmatpush1.msra.mxu0 0.0
        %571 = vmatprep.subr.mxu0 0.0
        %572 = vmatpush1.msra.mxu0 0.0
        %573 = vmatprep.subr.mxu0 0.0
        %574 = vmatpush1.msra.mxu0 0.0
        %575 = vmatprep.subr.mxu0 0.0
        %576 = vmatpush1.msra.mxu0 0.0
        %577 = vmatprep.subr.mxu0 0.0
        %578 = vmatpush1.msra.mxu0 0.0
        %579 = vmatprep.subr.mxu0 0.0
        %580 = vmatpush1.msra.mxu0 0.0
        %581 = vmatprep.subr.mxu0 0.0
        %582 = vmatpush1.msra.mxu0 0.0
        %583 = vmatprep.subr.mxu0 0.0
        %584 = vmatpush1.msra.mxu0 0.0
        %585 = vmatprep.subr.mxu0 0.0
        %586 = vmatpush1.msra.mxu0 0.0
        %587 = vmatprep.subr.mxu0 0.0
        %588 = vmatpush1.msra.mxu0 0.0
        %589 = vmatprep.subr.mxu0 0.0
        %590 = vmatpush1.msra.mxu0 0.0
        %591 = vmatprep.subr.mxu0 0.0
        %592 = vmatpush1.msra.mxu0 0.0
        %593 = vmatprep.subr.mxu0 0.0
        %594 = vmatpush1.msra.mxu0 0.0
        %595 = vmatprep.subr.mxu0 0.0
        %596 = vmatpush1.msra.mxu0 0.0
        %597 = vmatprep.subr.mxu0 0.0
        %598 = vmatpush1.msra.mxu0 0.0
        %599 = vmatprep.mubr.f32.mxu0 0.0
        %600 = vmatmul.mubr.f32.gmra.mrb[0].mxu0 %v511
        %v601 = vpop.f32.mrb[0].mxu0
        %v602 = vadd.f32 %v533, %v601
        %v603 = vpop.f32.mrb[0].mxu0
        %604 = vdwg.mxu0
        %605 = vst [vmem:[%s361] sm:$0xff] %v602
        %606 = vst [vmem:[#allocation2] sm:$0xff] %v602
        %s607 = sand.u32 %s226, 1
        %s608 = scalar_lea.sflag [#allocation5], %s607
        %s609 = sand.u32 %s226, 1
        %s610 = smul.addr %s609, 8
        %s611 = scalar_lea.vmem [#allocation8], %s610
        // Predicated region
        $region65: #{tpu_custom_call.1} parent=51 // pred_check
          %p612 = pneg %p236
        $region66: #{tpu_custom_call.1} parent=51 // pred_check_branch
          %614 = sbr.rel (%p612) target = $region68
        $region67: #{tpu_custom_call.1} parent=51 // pred_region
          %s616 = ssub.s32 128, 128
          %617 = vsyncadd %s608, %s616
          %s618 = sadd.s32 %s28, %s29
          %s619 = smul.addr %s618, 128
          %s620 = scalar_lea.hbm %s8, %s619
          %s622 = sshll.u32 %s611, 4
          %s623 = int_to_ptr.vmem [resolvable:$true] %s622
          %625 = dma.vmem_to_hbm [thread:$0]  %s623, 128, %s620, %s608
        $region68: #{tpu_custom_call.1} parent=51 // pred_fallthru
          _
      $region52: #{tpu_custom_call.1} parent=5 // pred_fallthru
        _
      %p626 = scmp.le.s32.totalorder 2, %s19
      // Predicated region
      $region69: #{tpu_custom_call.1} parent=5 // pred_check
        %p627 = pneg %p626
      $region70: #{tpu_custom_call.1} parent=5 // pred_check_branch
        %629 = sbr.rel (%p627) target = $region72
      $region71: #{tpu_custom_call.1} parent=5 // pred_region
        %s630 = ssub.s32 %s19, 2
        // Predicated region
        $region73: #{tpu_custom_call.1} parent=71 // pred_check
          %p631 = pneg %p242
        $region74: #{tpu_custom_call.1} parent=71 // pred_check_branch
          %633 = sbr.rel (%p631) target = $region76
        $region75: #{tpu_custom_call.1} parent=71 // pred_region
          %s634 = sand.u32 %s227, 1
          %s635 = scalar_lea.sflag [#allocation5], %s634
          %s636 = sand.u32 %s227, 1
          %s637 = smul.addr %s636, 8
          %s638 = scalar_lea.vmem [#allocation8], %s637
          %639 = dma.done %s635, 128
        $region76: #{tpu_custom_call.1} parent=71 // pred_fallthru
          _
      $region72: #{tpu_custom_call.1} parent=5 // pred_fallthru
        _
    $region6: #{tpu_custom_call.1} parent=1 // loop_footer
      %s23 = sadd.s32 1, %s19
    $region7: #{tpu_custom_call.1} parent=1 // loop_footer_branch
      %18 = sbr.rel target = $region3
    $region8: #{tpu_custom_call.1} parent=1 // loop_exit
      _
    %640 = vsyncpa [#allocation4], 1
    %s641 = scalar_lea.sflag [#allocation4], 1
    %642 = vsyncpa %s641, 1
    %643 = vsyncpa [#allocation7], 1
    %644 = vsyncpa [#allocation5], 1
    %s645 = scalar_lea.sflag [#allocation5], 1
    %646 = vsyncpa %s645, 1

</llo_original>
